<compile_context>
chip_gen: v7x
topology: tpu7x:2x2x1
jax: 0.10.0
libtpu: 0.0.40
codegen_flags: <defaults>
</compile_context>

<pallas_src>
import jax
import jax.numpy as jnp
from jax.experimental import pallas as pl
from jax.experimental.pallas import tpu as pltpu

_IN_EPS = 1e-5            # InstanceNorm1d default eps
_SUBLANE = 8
_LANE = 128
_BUF_BYTES = 4 << 20      # per-buffer VMEM target (2 arrays x 2 double-buffers ~= 16 MiB)
_SPLIT_BYTES = 512 << 10  # below this, a 2nd grid step is pure overhead


def _round_up(n, m):
    return (n + m - 1) // m * m


def _choose_tile(extent, unit, bytes_per_unit):
    """Tile size along the instance axis.

    Multiple of `unit` (8 sublanes or 128 lanes) or the full extent when tiny,
    capped by the VMEM budget, and split into >= 2 "parallel" grid steps for
    v7x's 2 TensorCores once there is enough work to amortize step overhead.
    """
    if extent <= unit:
        return extent                                      # full-extent block: always legal
    padded = _round_up(extent, unit)
    cap = max(1, _BUF_BYTES // bytes_per_unit) * unit      # VMEM-budget cap
    tile = min(padded, cap)
    total_bytes = (padded // unit) * bytes_per_unit
    if tile >= padded and total_bytes >= _SPLIT_BYTES and padded >= 2 * unit:
        tile = _round_up(pl.cdiv(padded, 2), unit)         # >= 2 steps for v7x megacore
    return tile


def _inorm_rows_kernel(x_ref, o_ref):
    # Block (Rt, L): each row is one (b, c) instance; reduce over the lane axis L.
    x = x_ref[...].astype(jnp.float32)
    mean = jnp.mean(x, axis=-1, keepdims=True)
    c = x - mean
    var = jnp.mean(c * c, axis=-1, keepdims=True)          # biased variance
    o_ref[...] = (c * jax.lax.rsqrt(var + _IN_EPS)).astype(o_ref.dtype)


def _inorm_cols_kernel(x_ref, o_ref):
    # Block (L, Rt): each lane/column is one (b, c) instance; reduce over sublane axis L.
    x = x_ref[...].astype(jnp.float32)
    mean = jnp.mean(x, axis=0, keepdims=True)
    c = x - mean
    var = jnp.mean(c * c, axis=0, keepdims=True)           # biased variance
    o_ref[...] = (c * jax.lax.rsqrt(var + _IN_EPS)).astype(o_ref.dtype)


def log_transform_forward(x, epsilon_param=None):
    """x: (B, 1, C, L) -> (B, 1, C, L). `epsilon_param` is unused (matches PyTorch)."""
    B, one, C, L = x.shape
    assert one == 1, "expected singleton dim=1 like the PyTorch module"
    R = B * C
    itemsize = jnp.dtype(x.dtype).itemsize
    x2 = x.reshape(R, L)

    # TODO(synk): for very large L (whole instance no longer fits one block) add an
    # "arbitrary" reduction grid axis over L with sum / sum-of-squares accumulators
    # finalized via pl.when on the last step.
    if L >= _LANE:
        # (R, L) is already lane-dense; tile the row (sublane) axis only.
        rt = _choose_tile(R, _SUBLANE, _SUBLANE * _round_up(L, _LANE) * itemsize)
        out2 = pl.pallas_call(
            _inorm_rows_kernel,
            out_shape=jax.ShapeDtypeStruct((R, L), x.dtype),
            grid=(pl.cdiv(R, rt),),
            in_specs=[pl.BlockSpec((rt, L), lambda i: (i, 0))],
            out_specs=pl.BlockSpec((rt, L), lambda i: (i, 0)),
            compiler_params=pltpu.CompilerParams(dimension_semantics=("parallel",)),
        )(x2)
        return out2.reshape(x.shape)

    # L < 128: present (L, R) so the instance axis fills the lanes (unmasked,
    # lane-dense stores). The wrapper transpose is layout plumbing, not compute.
    xt = x2.T  # (L, R)
    ct = _choose_tile(R, _LANE, _round_up(L, _SUBLANE) * _LANE * itemsize)
    outt = pl.pallas_call(
        _inorm_cols_kernel,
        out_shape=jax.ShapeDtypeStruct((L, R), x.dtype),
        grid=(pl.cdiv(R, ct),),
        in_specs=[pl.BlockSpec((L, ct), lambda i: (0, i))],
        out_specs=pl.BlockSpec((L, ct), lambda i: (0, i)),
        compiler_params=pltpu.CompilerParams(dimension_semantics=("parallel",)),
    )(xt)
    return outt.T.reshape(x.shape)


def _reference(x):
    B, _, C, L = x.shape
    x3 = x.reshape(B * C, L)
    mean = jnp.mean(x3, axis=-1, keepdims=True)
    var = jnp.mean((x3 - mean) ** 2, axis=-1, keepdims=True)
    return ((x3 - mean) / jnp.sqrt(var + _IN_EPS)).reshape(x.shape)


if __name__ == "__main__":
    key = jax.random.PRNGKey(0)
    B, C, L = 2, 20, 16  # C=20 matches the (unused) epsilon parameter's shape
    x = jax.random.normal(key, (B, 1, C, L), dtype=jnp.float32)

    # nn.Parameter(torch.zeros(1, 1, 20, 1)) — unused in forward, mirrored for fidelity.
    epsilon_param = jnp.zeros((1, 1, 20, 1), dtype=jnp.float32)

    # Lane-sparse L (<128) -> transposed (L, R) path, single block.
    out = jax.block_until_ready(log_transform_forward(x, epsilon_param))
    assert jnp.allclose(out, _reference(x), atol=1e-5, rtol=1e-5)

    # Also exercise the lane-dense (R, L) path with L = 128, single block.
    x_big = jax.random.normal(jax.random.PRNGKey(1), (B, 1, C, 128), dtype=jnp.float32)
    out_big = jax.block_until_ready(log_transform_forward(x_big, epsilon_param))
    assert jnp.allclose(out_big, _reference(x_big), atol=1e-5, rtol=1e-5)

    print("KERNEL_OK")
</pallas_src>

<mosaic_0001>
module attributes {stable_mosaic.version = 11 : i64} {
  func.func @_inorm_cols_kernel(%arg0: i32, %arg1: memref<16x40xf32, #tpu.memory_space<vmem>>, %arg2: memref<16x40xf32, #tpu.memory_space<vmem>>) attributes {dimension_semantics = [#tpu.dimension_semantics<parallel>], iteration_bounds = array<i64: 1>, scalar_prefetch = 0 : i64, scratch_operands = 0 : i64, tpu.core_type = #tpu.core_type<tc>, window_params = [{transform_indices = @transform_0, window_bounds = array<i64: 16, 40>}, {transform_indices = @transform_1, window_bounds = array<i64: 16, 40>}]} {
    %c0 = arith.constant 0 : index
    %c0_0 = arith.constant 0 : index
    %0 = vector.load %arg1[%c0, %c0_0] : memref<16x40xf32, #tpu.memory_space<vmem>>, vector<16x40xf32>
    %cst = arith.constant dense<0.000000e+00> : vector<40xf32>
    %1 = vector.multi_reduction <add>, %0, %cst [0] : vector<16x40xf32> to vector<40xf32>
    %2 = vector.shape_cast %1 : vector<40xf32> to vector<1x40xf32>
    %cst_1 = arith.constant 1.600000e+01 : f32
    %3 = vector.broadcast %cst_1 : f32 to vector<1x40xf32>
    %4 = arith.divf %2, %3 : vector<1x40xf32>
    %5 = vector.broadcast %4 : vector<1x40xf32> to vector<16x40xf32>
    %6 = arith.subf %0, %5 : vector<16x40xf32>
    %7 = arith.mulf %6, %6 : vector<16x40xf32>
    %cst_2 = arith.constant dense<0.000000e+00> : vector<40xf32>
    %8 = vector.multi_reduction <add>, %7, %cst_2 [0] : vector<16x40xf32> to vector<40xf32>
    %9 = vector.shape_cast %8 : vector<40xf32> to vector<1x40xf32>
    %cst_3 = arith.constant 1.600000e+01 : f32
    %10 = vector.broadcast %cst_3 : f32 to vector<1x40xf32>
    %11 = arith.divf %9, %10 : vector<1x40xf32>
    %cst_4 = arith.constant 9.99999974E-6 : f32
    %12 = vector.broadcast %cst_4 : f32 to vector<1x40xf32>
    %13 = arith.addf %11, %12 : vector<1x40xf32>
    %14 = math.rsqrt %13 : vector<1x40xf32>
    %15 = vector.broadcast %14 : vector<1x40xf32> to vector<16x40xf32>
    %16 = arith.mulf %6, %15 : vector<16x40xf32>
    %c0_5 = arith.constant 0 : index
    %c0_6 = arith.constant 0 : index
    %17 = vector.load %arg2[%c0_5, %c0_6] : memref<16x40xf32, #tpu.memory_space<vmem>>, vector<16x40xf32>
    tpu.vector_store %arg2[%c0_5, %c0_6], %16 {strides = array<i32>} : memref<16x40xf32, #tpu.memory_space<vmem>>, vector<16x40xf32>,
    return
  }
  func.func @transform_0(%arg0: i32) -> (i32, i32) {
    %c0_i32 = arith.constant 0 : i32
    %c0_i32_0 = arith.constant 0 : i32
    return %c0_i32, %arg0 : i32, i32
  }
  func.func @transform_1(%arg0: i32) -> (i32, i32) {
    %c0_i32 = arith.constant 0 : i32
    %c0_i32_0 = arith.constant 0 : i32
    return %c0_i32, %arg0 : i32, i32
  }
}

</mosaic_0001>

<llo_original>
// kernel: tpu_custom_call.1
$region0: #{tpu_custom_call.1}
  #allocation0 [shape = 'u32[]', space=smem, size = 0x4, offset = 0x4, fixed_abs, tag = 'smem constant byte address 0x4 - core index']
  #allocation1 [shape = 'u32[144,128]{1,0:T(1,128)}', space=vmem, size = 0x12000, scoped, tag = 'internal scratch']
  %s0 = inlined_call_operand.hbm [shape: f32[16,40], index: 0, kind: input, shape index: {}]
  %s1 = inlined_call_operand.hbm [shape: f32[16,40], index: 1, kind: output, shape index: {}]
  %s2 = sld [smem:[#allocation0]]
  $region18: #{tpu_custom_call.1} parent=0
    _
  %s4 = ssub.s32 1, %s2
  %s5 = scalar_select 0, %s4, %s2
  $region1: #{tpu_custom_call.1} parent=0
    #allocation2 [shape = 'u8[8192]{0}', space=vmem, size = 0x2000, scoped, tag = 'input window, operand 0, single buffered']
    #allocation3 [shape = 's32[1]{0}', space=sflag, size = 0x4, scoped, tag = 'scoped memory for tpu_custom_call.1']
    #allocation4 [shape = 's32[1]{0}', space=sflag, size = 0x4, scoped, tag = 'scoped memory for tpu_custom_call.1']
    #allocation5 [shape = 'u8[8192]{0}', space=vmem, size = 0x2000, scoped, tag = 'output window, operand 0, single buffered']
    %6 = vsyncpa [#allocation3], 0
    %7 = vsyncpa [#allocation4], 0
    // Predicated region
    $region2: #{tpu_custom_call.1} parent=1 // pred_check
      _
    $region3: #{tpu_custom_call.1} parent=1 // pred_check_branch
      %9 = sbr.rel (0) target = $region5
    $region4: #{tpu_custom_call.1} parent=1 // pred_region
      %s11 = ssub.s32 256, 256
      %12 = vsyncadd [#allocation3], %s11
      %s13 = sshll.u32 [#allocation2], 4
      %s14 = int_to_ptr.vmem [resolvable:$true] %s13
      %19 = dma.hbm_to_vmem [thread:$0]  %s0, 256, %s14, [#allocation3], 128, 128, 8
    $region5: #{tpu_custom_call.1} parent=1 // pred_fallthru
      _
    // Predicated region
    $region6: #{tpu_custom_call.1} parent=1 // pred_check
      _
    $region7: #{tpu_custom_call.1} parent=1 // pred_check_branch
      %21 = sbr.rel (0) target = $region9
    $region8: #{tpu_custom_call.1} parent=1 // pred_region
      %22 = dma.done [#allocation3], 256
    $region9: #{tpu_custom_call.1} parent=1 // pred_fallthru
      _
    %v23 = vld [vmem:[#allocation2] sm:$0xff]
    %v24 = vld [vmem:[#allocation2 + $0x8] sm:$0xff]
    %vm25 = vcmask 326656
    %v26 = vsel %vm25, %v23, 0.0
    %v27 = vsel %vm25, %v24, 0.0
    %v28 = vadd.f32 %v26, %v27
    %v29 = vrot.slane %v28, 4
    %v30 = vadd.f32 %v28, %v29
    %v31 = vrot.slane %v30, 2
    %v32 = vadd.f32 %v30, %v31
    %v33 = vrot.slane %v32, 1
    %v34 = vadd.f32 %v32, %v33
    %v35 = vrcp.pop 16.0
    %v36 = vmul.f32 %v34, %v35
    %v37 = vsub.f32 %v23, %v36
    %v38 = vsub.f32 %v24, %v36
    %v39 = vmul.f32 %v37, %v37
    %v40 = vmul.f32 %v38, %v38
    %v41 = vsel %vm25, %v39, 0.0
    %v42 = vsel %vm25, %v40, 0.0
    %v43 = vadd.f32 %v41, %v42
    %v44 = vrot.slane %v43, 4
    %v45 = vadd.f32 %v43, %v44
    %v46 = vrot.slane %v45, 2
    %v47 = vadd.f32 %v45, %v46
    %v48 = vrot.slane %v47, 1
    %v49 = vadd.f32 %v47, %v48
    %v50 = vmul.f32 %v49, %v35
    %v51 = vadd.f32 %v50, 1e-05
    %v52 = vrsqrt.pop %v51
    %v53 = vmul.f32 %v37, %v52
    %v54 = vmul.f32 %v38, %v52
    %55 = vst.msk [vmem:[#allocation5] sm:$0xff] %vm25, %v53
    %56 = vst.msk [vmem:[#allocation5 + $0x8] sm:$0xff] %vm25, %v54
    // Predicated region
    $region10: #{tpu_custom_call.1} parent=1 // pred_check
      _
    $region11: #{tpu_custom_call.1} parent=1 // pred_check_branch
      %58 = sbr.rel (0) target = $region13
    $region12: #{tpu_custom_call.1} parent=1 // pred_region
      %s60 = ssub.s32 256, 256
      %61 = vsyncadd [#allocation4], %s60
      %s62 = sshll.u32 [#allocation5], 4
      %s63 = int_to_ptr.vmem [resolvable:$true] %s62
      %68 = dma.vmem_to_hbm [thread:$0]  %s63, 256, %s1, [#allocation4], 128, 128, 8
    $region13: #{tpu_custom_call.1} parent=1 // pred_fallthru
      _
    // Predicated region
    $region14: #{tpu_custom_call.1} parent=1 // pred_check
      _
    $region15: #{tpu_custom_call.1} parent=1 // pred_check_branch
      %70 = sbr.rel (0) target = $region17
    $region16: #{tpu_custom_call.1} parent=1 // pred_region
      %71 = dma.done [#allocation4], 256
    $region17: #{tpu_custom_call.1} parent=1 // pred_fallthru
      _
    %72 = vsyncpa [#allocation3], 1
    %73 = vsyncpa [#allocation4], 1

</llo_original>
